<compile_context>
chip_gen: v5e
topology: v5e:2x2
jax: 0.10.0
libtpu: 0.0.40
codegen_flags: <defaults>
</compile_context>

<pallas_src>
import jax
import jax.numpy as jnp
from jax.experimental import pallas as pl
from jax.experimental.pallas import tpu as pltpu


def seqpool_pool_kernel(x_ref, attnw_ref, o_ref):
    # x_ref:     (B, m, d)  token block (f32, or bf16 when cast_x_to_bf16=True)
    # attnw_ref: (m, d)     resident attention weights, pre-broadcast over d
    # o_ref:     (B, d)     pooled class tokens for this block
    xb = x_ref[...].astype(jnp.float32)              # no-op when x is already f32
    weighted = xb * attnw_ref[...][None, :, :]       # VPU multiply, bcast over B
    o_ref[...] = jnp.sum(weighted, axis=1).astype(o_ref.dtype)   # sublane reduce


def _pick_block_b(n, m, d, itemsize=4, vmem_budget_bytes=16 << 20):
    """Largest batch block B that divides n, keeps the out BlockSpec legal
    (B multiple of 8, or B == n), and whose double-buffered VMEM footprint
    (2x x block + 2x out block) stays under `vmem_budget_bytes`.  Among viable
    blocks, prefer one giving an even grid so v7x's two TensorCores get equal
    shares of the 'parallel' axis."""
    def fits(b):
        return 2 * b * m * d * itemsize + 2 * b * d * 4 <= vmem_budget_bytes

    divisors = [b for b in range(1, n + 1) if n % b == 0]
    legal = [b for b in divisors if (b % 8 == 0 or b == n) and fits(b)]
    if not legal:
        return n                      # single full block: always BlockSpec-legal
    best = max(legal)
    even = [b for b in legal if (n // b) % 2 == 0 and 2 * b >= best]
    return max(even) if even else best


def seqpool(x, w1, w2, gamma, beta, attention_biases, *, block_b=None,
            cast_x_to_bf16=False):
    """Pallas SeqPool forward.

    w1/w2/gamma are accepted to mirror the module's parameter list, but the
    degenerate size-1 LayerNorm makes the score-MLP output identically equal to
    `beta`, so only beta and attention_biases affect the result.  This is a
    property of the original module, not an approximation.
    """
    n, m, d = x.shape
    _ = (w1, w2, gamma)   # dead parameters of the original forward (see note)

    # attn = softmax(beta + attention_biases): one length-m softmax shared by
    # every batch row.  Pre-broadcast over d so the kernel needs no in-kernel
    # lane broadcast of a 1-wide value.
    beta_s = jnp.asarray(beta, jnp.float32).reshape(-1)[0]
    logits = beta_s + jnp.asarray(attention_biases, jnp.float32).reshape(m)
    attn = jax.nn.softmax(logits)                                   # (m,)
    attn_w = jnp.broadcast_to(attn[:, None], (m, d)).astype(jnp.float32)

    x_in = x.astype(jnp.bfloat16) if cast_x_to_bf16 else x.astype(jnp.float32)
    itemsize = 2 if cast_x_to_bf16 else 4
    if block_b is None:
        block_b = _pick_block_b(n, m, d, itemsize=itemsize)
    assert n % block_b == 0, "batch must be divisible by the batch block size"

    return pl.pallas_call(
        seqpool_pool_kernel,
        out_shape=jax.ShapeDtypeStruct((n, d), jnp.float32),
        grid=(n // block_b,),
        in_specs=[
            pl.BlockSpec((block_b, m, d), lambda i: (i, 0, 0)),  # x: contiguous DMA
            pl.BlockSpec((m, d), lambda i: (0, 0)),              # attn table: resident
        ],
        out_specs=pl.BlockSpec((block_b, d), lambda i: (i, 0)),
        compiler_params=pltpu.CompilerParams(
            dimension_semantics=("parallel",),        # shards across v7x's 2 TCs
            vmem_limit_bytes=48 * 1024 * 1024),       # headroom within v7x's 64 MiB
    )(x_in, attn_w)


def seqpool_ref(x, w1, w2, gamma, beta, attention_biases):
    """Pure-JAX reference mirroring the full PyTorch forward graph."""
    h = jnp.maximum(jnp.einsum('nmd,de->nme', x, w1), 0.0)
    s = jnp.maximum(jnp.einsum('nme,eo->nmo', h, w2), 0.0)           # (n, m, 1)
    eps = 1e-5
    mean = jnp.mean(s, axis=-1, keepdims=True)
    var = jnp.mean((s - mean) ** 2, axis=-1, keepdims=True)
    score = ((s - mean) / jnp.sqrt(var + eps)) * gamma + beta
    score = jnp.squeeze(score, axis=-1)                              # (n, m)
    attn = jax.nn.softmax(score + attention_biases[None, :], axis=-1)
    return jnp.einsum('nm,nmd->nd', attn, x)


if __name__ == "__main__":
    n, m, d = 16, 8, 32   # batch, num_tokens, dim (small test shape)

    key = jax.random.PRNGKey(0)
    kx, kw1, kw2, kb = jax.random.split(key, 4)

    x = jax.random.normal(kx, (n, m, d), dtype=jnp.float32)

    # Parameter shapes from the module __init__ (Linear weights stored as W.T).
    w1 = jax.random.normal(kw1, (d, 2 * d), dtype=jnp.float32) * 0.05   # Linear(d, 2d)
    w2 = jax.random.normal(kw2, (2 * d, 1), dtype=jnp.float32) * 0.05   # Linear(2d, 1)
    gamma = jnp.ones((1,), dtype=jnp.float32)                           # LayerNorm(1).weight
    beta = jnp.zeros((1,), dtype=jnp.float32)                           # LayerNorm(1).bias
    # Module init is zeros; small random values exercise the softmax path.
    attention_biases = jax.random.normal(kb, (m,), dtype=jnp.float32) * 0.1

    out = seqpool(x, w1, w2, gamma, beta, attention_biases)
    out = jax.block_until_ready(out)

    ref = seqpool_ref(x, w1, w2, gamma, beta, attention_biases)
    assert out.shape == (n, d)
    assert jnp.allclose(out, ref, atol=1e-5, rtol=1e-5), "mismatch vs full-graph reference"

    print("KERNEL_OK")
</pallas_src>

<mosaic_0001>
module attributes {stable_mosaic.version = 11 : i64} {
  func.func @seqpool_pool_kernel(%arg0: i32, %arg1: memref<8x8x32xf32, #tpu.memory_space<vmem>>, %arg2: memref<8x32xf32, #tpu.memory_space<vmem>>, %arg3: memref<8x32xf32, #tpu.memory_space<vmem>>) attributes {dimension_semantics = [#tpu.dimension_semantics<parallel>], iteration_bounds = array<i64: 2>, scalar_prefetch = 0 : i64, scratch_operands = 0 : i64, tpu.core_type = #tpu.core_type<tc>, window_params = [{transform_indices = @transform_0, window_bounds = array<i64: 8, 8, 32>}, {pipeline_mode = #tpu.pipeline_mode<synchronous>, transform_indices = @transform_1, window_bounds = array<i64: 8, 32>}, {transform_indices = @transform_2, window_bounds = array<i64: 8, 32>}]} {
    %c0 = arith.constant 0 : index
    %c0_0 = arith.constant 0 : index
    %c0_1 = arith.constant 0 : index
    %0 = vector.load %arg1[%c0, %c0_0, %c0_1] : memref<8x8x32xf32, #tpu.memory_space<vmem>>, vector<8x8x32xf32>
    %c0_2 = arith.constant 0 : index
    %c0_3 = arith.constant 0 : index
    %1 = vector.load %arg2[%c0_2, %c0_3] : memref<8x32xf32, #tpu.memory_space<vmem>>, vector<8x32xf32>
    %2 = vector.shape_cast %1 : vector<8x32xf32> to vector<1x8x32xf32>
    %3 = vector.broadcast %2 : vector<1x8x32xf32> to vector<8x8x32xf32>
    %4 = arith.mulf %0, %3 : vector<8x8x32xf32>
    %cst = arith.constant dense<0.000000e+00> : vector<8x32xf32>
    %5 = vector.multi_reduction <add>, %4, %cst [1] : vector<8x8x32xf32> to vector<8x32xf32>
    %c0_4 = arith.constant 0 : index
    %c0_5 = arith.constant 0 : index
    %6 = vector.load %arg3[%c0_4, %c0_5] : memref<8x32xf32, #tpu.memory_space<vmem>>, vector<8x32xf32>
    tpu.vector_store %arg3[%c0_4, %c0_5], %5 {strides = array<i32>} : memref<8x32xf32, #tpu.memory_space<vmem>>, vector<8x32xf32>,
    return
  }
  func.func @transform_0(%arg0: i32) -> (i32, i32, i32) {
    %c0_i32 = arith.constant 0 : i32
    %c0_i32_0 = arith.constant 0 : i32
    %c0_i32_1 = arith.constant 0 : i32
    return %arg0, %c0_i32, %c0_i32_0 : i32, i32, i32
  }
  func.func @transform_1(%arg0: i32) -> (i32, i32) {
    %c0_i32 = arith.constant 0 : i32
    %c0_i32_0 = arith.constant 0 : i32
    %c0_i32_1 = arith.constant 0 : i32
    return %c0_i32, %c0_i32_0 : i32, i32
  }
  func.func @transform_2(%arg0: i32) -> (i32, i32) {
    %c0_i32 = arith.constant 0 : i32
    %c0_i32_0 = arith.constant 0 : i32
    return %arg0, %c0_i32 : i32, i32
  }
}

</mosaic_0001>

<llo_original>
// kernel: tpu_custom_call.1
$region0: #{tpu_custom_call.1}
  #allocation0 [shape = 'u32[]', space=smem, size = 0x4, offset = 0x4, fixed_abs, tag = 'smem constant byte address 0x4 - core index']
  #allocation1 [shape = 'u32[72,128]{1,0:T(1,128)}', space=vmem, size = 0x9000, scoped, tag = 'internal scratch']
  %s0 = inlined_call_operand.hbm [shape: f32[16,8,32], index: 0, kind: input, shape index: {}]
  %s1 = inlined_call_operand.hbm [shape: f32[8,32], index: 1, kind: input, shape index: {}]
  %s2 = inlined_call_operand.hbm [shape: f32[16,32], index: 2, kind: output, shape index: {}]
  %s3 = sld [smem:[#allocation0]]
  $region49: #{tpu_custom_call.1} parent=0
    _
  %s5 = ssub.s32 1, %s3
  %s6 = scalar_select 0, %s5, %s3
  $region1: #{tpu_custom_call.1} parent=0
    #allocation2 [shape = 'u8[65536]{0}', space=vmem, size = 0x10000, scoped, tag = 'input window, operand 0']
    #allocation3 [shape = 's32[2]{0}', space=sflag, size = 0x8, scoped, tag = 'scoped memory for tpu_custom_call.1']
    #allocation4 [shape = 's32[2]{0}', space=sflag, size = 0x8, scoped, tag = 'scoped memory for tpu_custom_call.1']
    #allocation5 [shape = 'u8[4096]{0}', space=vmem, size = 0x1000, scoped, tag = 'input window, operand 1, single buffered']
    #allocation6 [shape = 's32[1]{0}', space=sflag, size = 0x4, scoped, tag = 'scoped memory for tpu_custom_call.1']
    #allocation7 [shape = 'u8[8192]{0}', space=vmem, size = 0x2000, scoped, tag = 'output window, operand 0']
    %7 = vsyncpa [#allocation3], 0
    %s8 = scalar_lea.sflag [#allocation3], 1
    %9 = vsyncpa %s8, 0
    %10 = vsyncpa [#allocation6], 0
    %11 = vsyncpa [#allocation4], 0
    %s12 = scalar_lea.sflag [#allocation4], 1
    %13 = vsyncpa %s12, 0
    loop: start=0, step=1, limit=4
    $region2: #{tpu_custom_call.1} parent=1 // loop_pre_header
      _
    $region3: #{tpu_custom_call.1} parent=1 // loop_header
      %s15 = sphi 0, %s19
      %p16 = scmp.ge.s32.totalorder %s15, 4
      %s25 = sphi 0, %s27
      %s28 = sphi 0, %s25
      %s29 = sphi 0, %s28
      %s45 = sphi 0, %s29
      %s49 = sphi 0, %s49
      %s51 = sphi 0, %s49
      %s52 = sphi 0, %s51
      %s66 = sphi 0, %s52
      %s72 = sphi 0, %s74
      %s75 = sphi 0, %s72
      %s76 = sphi 0, %s75
      %s92 = sphi 0, %s76
    $region4: #{tpu_custom_call.1} parent=1 // loop_header_branch
      %18 = sbr.rel (%p16) target = $region8
    $region5: #{tpu_custom_call.1} parent=1 // loop_body
      %s20 = ssub.s32 %s15, 1
      %s21 = ssub.s32 %s15, 2
      %s22 = sadd.s32 %s15, 1
      %s23 = ssub.s32 %s15, %s22
      %p24 = scmp.eq.s32.totalorder %s23, 0
      %s26 = sadd.s32 %s25, 1
      %s27 = scalar_select %p24, %s25, %s26
      %p30 = pneg %p24
      %p31 = scmp.eq.s32.totalorder %s15, 1
      %p32 = por %p30, %p31
      %p33 = scmp.ne.s32.totalorder %s25, %s28
      %p34 = scmp.eq.s32.totalorder %s15, 0
      %p35 = por %p33, %p34
      %p36 = scmp.ne.s32.totalorder %s25, %s28
      %p37 = scmp.eq.s32.totalorder %s20, 1
      %p38 = por %p36, %p37
      %p39 = scmp.ne.s32.totalorder %s28, %s29
      %p40 = scmp.eq.s32.totalorder %s20, 0
      %p41 = por %p39, %p40
      %p42 = scmp.ne.s32.totalorder %s28, %s29
      %p43 = scmp.eq.s32.totalorder %s21, 1
      %p44 = por %p42, %p43
      %p46 = scmp.ne.s32.totalorder %s29, %s45
      %p47 = scmp.eq.s32.totalorder %s21, 0
      %p48 = por %p46, %p47
      %s50 = sadd.s32 %s49, 1
      %p53 = scmp.eq.s32.totalorder %s15, 1
      %p54 = scmp.ne.s32.totalorder %s49, %s51
      %p55 = scmp.eq.s32.totalorder %s15, 0
      %p56 = por %p54, %p55
      %p57 = scmp.ne.s32.totalorder %s49, %s51
      %p58 = scmp.eq.s32.totalorder %s20, 1
      %p59 = por %p57, %p58
      %p60 = scmp.ne.s32.totalorder %s51, %s52
      %p61 = scmp.eq.s32.totalorder %s20, 0
      %p62 = por %p60, %p61
      %p63 = scmp.ne.s32.totalorder %s51, %s52
      %p64 = scmp.eq.s32.totalorder %s21, 1
      %p65 = por %p63, %p64
      %p67 = scmp.ne.s32.totalorder %s52, %s66
      %p68 = scmp.eq.s32.totalorder %s21, 0
      %p69 = por %p67, %p68
      %s70 = ssub.s32 %s15, %s22
      %p71 = scmp.eq.s32.totalorder %s70, 0
      %s73 = sadd.s32 %s72, 1
      %s74 = scalar_select %p71, %s72, %s73
      %p77 = pneg %p71
      %p78 = scmp.eq.s32.totalorder %s15, 1
      %p79 = por %p77, %p78
      %p80 = scmp.ne.s32.totalorder %s72, %s75
      %p81 = scmp.eq.s32.totalorder %s15, 0
      %p82 = por %p80, %p81
      %p83 = scmp.ne.s32.totalorder %s72, %s75
      %p84 = scmp.eq.s32.totalorder %s20, 1
      %p85 = por %p83, %p84
      %p86 = scmp.ne.s32.totalorder %s75, %s76
      %p87 = scmp.eq.s32.totalorder %s20, 0
      %p88 = por %p86, %p87
      %p89 = scmp.ne.s32.totalorder %s75, %s76
      %p90 = scmp.eq.s32.totalorder %s21, 1
      %p91 = por %p89, %p90
      %p93 = scmp.ne.s32.totalorder %s76, %s92
      %p94 = scmp.eq.s32.totalorder %s21, 0
      %p95 = por %p93, %p94
      %p96 = scmp.le.s32.totalorder 1, %s15
      %p97 = scmp.lt.s32.totalorder %s15, 3
      %p98 = pnand %p96, %p97
      %p99 = pneg %p98
      // Predicated region
      $region9: #{tpu_custom_call.1} parent=5 // pred_check
        _
      $region10: #{tpu_custom_call.1} parent=5 // pred_check_branch
        %101 = sbr.rel (%p98) target = $region12
      $region11: #{tpu_custom_call.1} parent=5 // pred_region
        %s102 = ssub.s32 %s15, 1
        // Predicated region
        $region13: #{tpu_custom_call.1} parent=11 // pred_check
          %p103 = pneg %p62
        $region14: #{tpu_custom_call.1} parent=11 // pred_check_branch
          %105 = sbr.rel (%p103) target = $region16
        $region15: #{tpu_custom_call.1} parent=11 // pred_region
          %107 = vsyncadd [#allocation6], 0
          %s109 = sshll.u32 %s1, 4
          %s110 = int_to_ptr.hbm [resolvable:$true] %s109
          %s111 = sshll.u32 [#allocation5], 4
          %s112 = int_to_ptr.vmem [resolvable:$true] %s111
          %114 = dma.hbm_to_vmem [thread:$0]  %s110, 128, %s112, [#allocation6]
        $region16: #{tpu_custom_call.1} parent=11 // pred_fallthru
          _
      $region12: #{tpu_custom_call.1} parent=5 // pred_fallthru
        _
      %p115 = scmp.lt.s32.totalorder %s15, 2
      // Predicated region
      $region17: #{tpu_custom_call.1} parent=5 // pred_check
        %p116 = pneg %p115
      $region18: #{tpu_custom_call.1} parent=5 // pred_check_branch
        %118 = sbr.rel (%p116) target = $region20
      $region19: #{tpu_custom_call.1} parent=5 // pred_region
        // Predicated region
        $region21: #{tpu_custom_call.1} parent=19 // pred_check
          %p119 = pneg %p35
        $region22: #{tpu_custom_call.1} parent=19 // pred_check_branch
          %121 = sbr.rel (%p119) target = $region24
        $region23: #{tpu_custom_call.1} parent=19 // pred_region
          %s122 = sand.u32 %s25, 1
          %s123 = scalar_lea.sflag [#allocation3], %s122
          %s124 = sand.u32 %s25, 1
          %s125 = smul.addr %s124, 64
          %s126 = scalar_lea.vmem [#allocation2], %s125
          %s127 = smul.u32 8, %s15
          %129 = vsyncadd %s123, 0
          %s130 = smul.addr %s127, 8
          %s131 = scalar_lea.hbm %s0, %s130
          %s132 = sshll.u32 %s131, 4
          %s133 = int_to_ptr.hbm [resolvable:$true] %s132
          %s134 = sshll.u32 %s126, 4
          %s135 = int_to_ptr.vmem [resolvable:$true] %s134
          %140 = dma.hbm_to_vmem [thread:$0]  %s133, 1024, %s135, %s123, 128, 128, 8
        $region24: #{tpu_custom_call.1} parent=19 // pred_fallthru
          _
      $region20: #{tpu_custom_call.1} parent=5 // pred_fallthru
        _
      %p141 = scmp.le.s32.totalorder 1, %s15
      %p142 = scmp.lt.s32.totalorder %s15, 3
      %p143 = pnand %p141, %p142
      %p144 = pneg %p143
      // Predicated region
      $region25: #{tpu_custom_call.1} parent=5 // pred_check
        _
      $region26: #{tpu_custom_call.1} parent=5 // pred_check_branch
        %146 = sbr.rel (%p143) target = $region28
      $region27: #{tpu_custom_call.1} parent=5 // pred_region
        %s147 = ssub.s32 %s15, 1
        %s148 = sand.u32 %s28, 1
        %s149 = scalar_lea.sflag [#allocation3], %s148
        %s150 = sand.u32 %s28, 1
        %s151 = smul.addr %s150, 64
        %s152 = scalar_lea.vmem [#allocation2], %s151
        // Predicated region
        $region29: #{tpu_custom_call.1} parent=27 // pred_check
          %p153 = pneg %p41
        $region30: #{tpu_custom_call.1} parent=27 // pred_check_branch
          %155 = sbr.rel (%p153) target = $region32
        $region31: #{tpu_custom_call.1} parent=27 // pred_region
          %157 = dma.done %s149, 1024
        $region32: #{tpu_custom_call.1} parent=27 // pred_fallthru
          _
        // Predicated region
        $region33: #{tpu_custom_call.1} parent=27 // pred_check
          %p158 = pneg %p62
        $region34: #{tpu_custom_call.1} parent=27 // pred_check_branch
          %160 = sbr.rel (%p158) target = $region36
        $region35: #{tpu_custom_call.1} parent=27 // pred_region
          %162 = dma.done [#allocation6], 128
        $region36: #{tpu_custom_call.1} parent=27 // pred_fallthru
          _
        %s163 = sand.u32 %s28, 1
        %s164 = scalar_lea.sflag [#allocation3], %s163
        %s165 = sand.u32 %s28, 1
        %s166 = smul.addr %s165, 64
        %s167 = scalar_lea.vmem [#allocation2], %s166
        %p168 = pneg %p41
        %p169 = pneg %p38
        %p170 = pneg %p62
        %p171 = pneg %p59
        %p172 = pneg %p88
        %p173 = pneg %p85
        %s174 = sand.u32 %s75, 1
        %s175 = scalar_lea.sflag [#allocation4], %s174
        %s176 = sand.u32 %s75, 1
        %s177 = smul.addr %s176, 8
        %s178 = scalar_lea.vmem [#allocation7], %s177
        %s179 = smul.u32 8, %s20
        %v180 = vld [vmem:[%s152] sm:$0xff]
        %v181 = vld [vmem:[%s152 + $0x8] sm:$0xff]
        %v182 = vld [vmem:[%s152 + $0x10] sm:$0xff]
        %v183 = vld [vmem:[%s152 + $0x18] sm:$0xff]
        %v184 = vld [vmem:[%s152 + $0x20] sm:$0xff]
        %v185 = vld [vmem:[%s152 + $0x28] sm:$0xff]
        %v186 = vld [vmem:[%s152 + $0x30] sm:$0xff]
        %v187 = vld [vmem:[%s152 + $0x38] sm:$0xff]
        %v188 = vld [vmem:[#allocation5] sm:$0xff]
        %v189 = vmul.f32 %v180, %v188
        %v190 = vmul.f32 %v181, %v188
        %v191 = vmul.f32 %v182, %v188
        %v192 = vmul.f32 %v183, %v188
        %v193 = vmul.f32 %v184, %v188
        %v194 = vmul.f32 %v185, %v188
        %v195 = vmul.f32 %v186, %v188
        %v196 = vmul.f32 %v187, %v188
        %vm197 = vcmask 261120
        %v198 = vsel %vm197, %v189, 0.0
        %v199 = vrot.slane %v198, 4
        %v200 = vadd.f32 %v198, %v199
        %v201 = vrot.slane %v200, 2
        %v202 = vadd.f32 %v200, %v201
        %v203 = vrot.slane %v202, 1
        %v204 = vadd.f32 %v202, %v203
        %v205 = vsel %vm197, %v190, 0.0
        %v206 = vrot.slane %v205, 4
        %v207 = vadd.f32 %v205, %v206
        %v208 = vrot.slane %v207, 2
        %v209 = vadd.f32 %v207, %v208
        %v210 = vrot.slane %v209, 1
        %v211 = vadd.f32 %v209, %v210
        %v212 = vsel %vm197, %v191, 0.0
        %v213 = vrot.slane %v212, 4
        %v214 = vadd.f32 %v212, %v213
        %v215 = vrot.slane %v214, 2
        %v216 = vadd.f32 %v214, %v215
        %v217 = vrot.slane %v216, 1
        %v218 = vadd.f32 %v216, %v217
        %v219 = vsel %vm197, %v192, 0.0
        %v220 = vrot.slane %v219, 4
        %v221 = vadd.f32 %v219, %v220
        %v222 = vrot.slane %v221, 2
        %v223 = vadd.f32 %v221, %v222
        %v224 = vrot.slane %v223, 1
        %v225 = vadd.f32 %v223, %v224
        %v226 = vsel %vm197, %v193, 0.0
        %v227 = vrot.slane %v226, 4
        %v228 = vadd.f32 %v226, %v227
        %v229 = vrot.slane %v228, 2
        %v230 = vadd.f32 %v228, %v229
        %v231 = vrot.slane %v230, 1
        %v232 = vadd.f32 %v230, %v231
        %v233 = vsel %vm197, %v194, 0.0
        %v234 = vrot.slane %v233, 4
        %v235 = vadd.f32 %v233, %v234
        %v236 = vrot.slane %v235, 2
        %v237 = vadd.f32 %v235, %v236
        %v238 = vrot.slane %v237, 1
        %v239 = vadd.f32 %v237, %v238
        %v240 = vsel %vm197, %v195, 0.0
        %v241 = vrot.slane %v240, 4
        %v242 = vadd.f32 %v240, %v241
        %v243 = vrot.slane %v242, 2
        %v244 = vadd.f32 %v242, %v243
        %v245 = vrot.slane %v244, 1
        %v246 = vadd.f32 %v244, %v245
        %v247 = vsel %vm197, %v196, 0.0
        %v248 = vrot.slane %v247, 4
        %v249 = vadd.f32 %v247, %v248
        %v250 = vrot.slane %v249, 2
        %v251 = vadd.f32 %v249, %v250
        %v252 = vrot.slane %v251, 1
        %v253 = vadd.f32 %v251, %v252
        %vm262 = vcmask 1041409
        %v263 = vsel %vm262, %v211, %v204
        %vm264 = vcmask 1042434
        %v265 = vsel %vm264, %v218, %v263
        %vm266 = vcmask 1043459
        %v267 = vsel %vm266, %v225, %v265
        %vm268 = vcmask 1044484
        %v269 = vsel %vm268, %v232, %v267
        %vm270 = vcmask 1045509
        %v271 = vsel %vm270, %v239, %v269
        %vm272 = vcmask 1046534
        %v273 = vsel %vm272, %v246, %v271
        %vm274 = vcmask 1047559
        %v275 = vsel %vm274, %v253, %v273
        %277 = vst.msk [vmem:[%s178] sm:$0xff] %vm197, %v275
        %s278 = sand.u32 %s75, 1
        %s279 = scalar_lea.sflag [#allocation4], %s278
        %s280 = sand.u32 %s75, 1
        %s281 = smul.addr %s280, 8
        %s282 = scalar_lea.vmem [#allocation7], %s281
        // Predicated region
        $region37: #{tpu_custom_call.1} parent=27 // pred_check
          %p283 = pneg %p85
        $region38: #{tpu_custom_call.1} parent=27 // pred_check_branch
          %285 = sbr.rel (%p283) target = $region40
        $region39: #{tpu_custom_call.1} parent=27 // pred_region
          %287 = vsyncadd %s279, 0
          %s288 = smul.addr %s20, 8
          %s289 = scalar_lea.hbm %s2, %s288
          %s291 = sshll.u32 %s282, 4
          %s292 = int_to_ptr.vmem [resolvable:$true] %s291
          %s293 = sshll.u32 %s289, 4
          %s294 = int_to_ptr.hbm [resolvable:$true] %s293
          %296 = dma.vmem_to_hbm [thread:$0]  %s292, 128, %s294, %s279
        $region40: #{tpu_custom_call.1} parent=27 // pred_fallthru
          _
      $region28: #{tpu_custom_call.1} parent=5 // pred_fallthru
        _
      %p297 = scmp.le.s32.totalorder 2, %s15
      // Predicated region
      $region41: #{tpu_custom_call.1} parent=5 // pred_check
        %p298 = pneg %p297
      $region42: #{tpu_custom_call.1} parent=5 // pred_check_branch
        %300 = sbr.rel (%p298) target = $region44
      $region43: #{tpu_custom_call.1} parent=5 // pred_region
        %s301 = ssub.s32 %s15, 2
        // Predicated region
        $region45: #{tpu_custom_call.1} parent=43 // pred_check
          %p302 = pneg %p91
        $region46: #{tpu_custom_call.1} parent=43 // pred_check_branch
          %304 = sbr.rel (%p302) target = $region48
        $region47: #{tpu_custom_call.1} parent=43 // pred_region
          %s305 = sand.u32 %s76, 1
          %s306 = scalar_lea.sflag [#allocation4], %s305
          %s307 = sand.u32 %s76, 1
          %s308 = smul.addr %s307, 8
          %s309 = scalar_lea.vmem [#allocation7], %s308
          %311 = dma.done %s306, 128
        $region48: #{tpu_custom_call.1} parent=43 // pred_fallthru
          _
      $region44: #{tpu_custom_call.1} parent=5 // pred_fallthru
        _
    $region6: #{tpu_custom_call.1} parent=1 // loop_footer
      %s19 = sadd.s32 1, %s15
    $region7: #{tpu_custom_call.1} parent=1 // loop_footer_branch
      %14 = sbr.rel target = $region3
    $region8: #{tpu_custom_call.1} parent=1 // loop_exit
      _
    %312 = vsyncpa [#allocation3], 1
    %s313 = scalar_lea.sflag [#allocation3], 1
    %314 = vsyncpa %s313, 1
    %315 = vsyncpa [#allocation6], 1
    %316 = vsyncpa [#allocation4], 1
    %s317 = scalar_lea.sflag [#allocation4], 1
    %318 = vsyncpa %s317, 1

</llo_original>
